<compile_context>
chip_gen: v5e
topology: v5e:2x2
jax: 0.10.0
libtpu: 0.0.40
codegen_flags: <defaults>
</compile_context>

<pallas_src>
import jax
import jax.numpy as jnp
from jax.experimental import pallas as pl
from jax.experimental.pallas import tpu as pltpu

LEAKY_ALPHA = 0.2   # nn.LeakyReLU default slope used by pyGAT layers
NEG_BIG = -9e15     # pyGAT's mask value for non-edges
LANE = 128


def _gat_layer(h, mask, w, a_packed, concat):
    """One GraphAttentionLayer over Bb graphs stacked along rows.

    h:        (M, P) node features, M = Bb*N (lane-padded, real cols [:H])
    mask:     (M, M) block-diagonal binary edge mask, float32
    w:        (P, P) padded weight (real block [:F, :H])
    a_packed: (P, LANE) col 0 = a1, col 1 = a2 (rows [:H]), rest zero
    """
    wh = jnp.dot(h, w, preferred_element_type=jnp.float32)             # (M, P)
    # Fused attention projections: one MXU matmul, one lane tile of output.
    f = jnp.dot(wh, a_packed, preferred_element_type=jnp.float32)      # (M, LANE)
    f1 = f[:, 0:1]                                                     # (M, 1)  Wh @ a1
    f2 = f[:, 1:2]                                                     # (M, 1)  Wh @ a2
    e = f1 + f2.T                                                      # (M, M)
    e = jnp.where(e > 0, e, LEAKY_ALPHA * e)                           # LeakyReLU(0.2)
    # Exact pyGAT masking BEFORE the row max: non-edges (including the
    # cross-graph entries of the stacked block) become -9e15, so they can
    # neither dominate the row max nor overflow the exp.
    e = jnp.where(mask > 0, e, NEG_BIG)                                # (M, M)
    m = jnp.max(e, axis=1, keepdims=True)                              # (M, 1)
    p = jnp.exp(e - m)                                                 # (M, M)
    denom = jnp.sum(p, axis=1, keepdims=True)                          # (M, 1)
    att = p * pl.reciprocal(denom)                                     # exact; (M,1) is cheap
    h_prime = jnp.dot(att, wh, preferred_element_type=jnp.float32)     # (M, P)
    if concat:
        # ELU(x) = x if x > 0 else exp(x) - 1  (clamp exp arg to <= 0).
        h_prime = jnp.where(h_prime > 0, h_prime,
                            jnp.exp(jnp.minimum(h_prime, 0.0)) - 1.0)
    return h_prime


def gat_encoder_kernel(x_ref, mask_ref, w_ref, a_ref, pool_ref, out_ref):
    h = x_ref[0]             # (M, P)    M = Bb*N stacked graphs
    mask = mask_ref[0]       # (M, M)    block-diagonal edge mask
    w = w_ref[...]           # (P, P)
    a_packed = a_ref[...]    # (P, LANE)

    h1 = _gat_layer(h, mask, w, a_packed, concat=True)    # attention1(x, adj)
    h2 = _gat_layer(h1, mask, w, a_packed, concat=False)  # attention1(h1, adj, concat=False)

    # Per-graph x.mean(dim=0): pool[b, b*N+i] = 1/N -> one tiny MXU matmul,
    # lane-dense (Bb, P) output store.
    out_ref[0] = jnp.dot(pool_ref[...], h2, preferred_element_type=jnp.float32)


def gat_encoder_forward(x, adj, w, a):
    """GATEncoder.forward.

    x: (N, F) or (B, N, F); adj: (N, N) or (B, N, N); w: (F, H); a: (2H, 1).
    Returns (H,) for a single graph or (B, H) for a batch.
    """
    single = x.ndim == 2
    if single:
        x = x[None]
        adj = adj[None]

    x = x.astype(jnp.float32)
    adj = adj.astype(jnp.float32)
    w = w.astype(jnp.float32)
    a = a.astype(jnp.float32)

    B, N, F = x.shape
    H = w.shape[1]
    assert w.shape[0] == F and a.shape == (2 * H, 1)
    # The module reuses attention1 on its own output, so F must equal H.
    assert F == H, "GATEncoder reuses attention1 on its own output; needs F == H"

    # Grid sizing: collapse the batch into few, fat steps (biggest lever at
    # tiny sizes), but keep 2 steps when B is even so both v7x TensorCores
    # stay busy under dimension_semantics=("parallel",).
    num_blocks = 2 if (B >= 2 and B % 2 == 0) else 1
    Bb = B // num_blocks          # graphs per grid step
    M = Bb * N                    # stacked rows per step

    # Pad lane axes up to a multiple of 128 so every MXU result and the output
    # store are full, unmasked vregs.  Zero padding is exact: padded feature
    # columns stay zero through both layers (ELU(0) == 0).
    P = LANE * pl.cdiv(max(F, H), LANE)
    x_pad = jnp.zeros((B, N, P), jnp.float32).at[:, :, :F].set(x)
    x_stacked = x_pad.reshape(num_blocks, M, P)
    w_pad = jnp.zeros((P, P), jnp.float32).at[:F, :H].set(w)
    a_pad = (jnp.zeros((P, LANE), jnp.float32)
             .at[:H, 0].set(a[:H, 0])        # a1
             .at[:H, 1].set(a[H:, 0]))       # a2

    # Block-diagonal binary edge mask (pyGAT keeps e where adj > 0): graph b of
    # each step occupies diagonal block (b, b); cross-graph entries are 0.
    # TODO(synk): a row with no edges (no self loop) degenerates to a uniform
    # softmax (as pyGAT's all--9e15 row does); graphs are expected to carry
    # self loops.
    edge = (adj > 0).astype(jnp.float32).reshape(num_blocks, Bb, N, N)
    eye_bb = jnp.eye(Bb, dtype=jnp.float32)
    mask_bd = jnp.einsum('gbij,bc->gbicj', edge, eye_bb).reshape(num_blocks, M, M)

    # Per-graph mean pooling matrix: pool[b, b*N + i] = 1/N.
    pool = jnp.repeat(jnp.eye(Bb, dtype=jnp.float32), N, axis=1) / N   # (Bb, M)

    out = pl.pallas_call(
        gat_encoder_kernel,
        out_shape=jax.ShapeDtypeStruct((num_blocks, Bb, P), jnp.float32),
        grid=(num_blocks,),
        in_specs=[
            pl.BlockSpec((1, M, P), lambda g: (g, 0, 0)),
            pl.BlockSpec((1, M, M), lambda g: (g, 0, 0)),
            pl.BlockSpec((P, P), lambda g: (0, 0)),
            pl.BlockSpec((P, LANE), lambda g: (0, 0)),
            pl.BlockSpec((Bb, M), lambda g: (0, 0)),
        ],
        out_specs=pl.BlockSpec((1, Bb, P), lambda g: (g, 0, 0)),
        compiler_params=pltpu.CompilerParams(
            # Independent graph blocks: shard across TensorCores on v7x.
            dimension_semantics=("parallel",),
            vmem_limit_bytes=32 << 20,
        ),
    )(x_stacked, mask_bd, w_pad, a_pad, pool)

    out = out.reshape(B, P)[:, :H]     # (B, H); drop lane padding
    return out[0] if single else out


def _reference_forward(x, adj, w, a):
    """Pure-JAX mirror of the PyTorch forward (single graph) for sanity check."""
    h = w.shape[1]
    a1, a2 = a[:h, :], a[h:, :]

    def layer(hx, concat):
        wh = hx @ w
        e = wh @ a1 + (wh @ a2).T
        e = jnp.where(e > 0, e, LEAKY_ALPHA * e)
        att = jnp.where(adj > 0, e, NEG_BIG)
        att = jax.nn.softmax(att, axis=1)
        hp = att @ wh
        if concat:
            hp = jnp.where(hp > 0, hp, jnp.exp(jnp.minimum(hp, 0.0)) - 1.0)
        return hp

    return layer(layer(x, True), False).mean(axis=0)


if __name__ == "__main__":
    B = 4            # graphs per batch (stacked 2-per-block; grid=(2,) for v7x TCs)
    N = 8            # nodes per graph
    FEATURES = 32    # num_features == hidden_size (required by the module's forward)
    HIDDEN = 32

    key = jax.random.PRNGKey(0)
    kx, kadj, kw, ka = jax.random.split(key, 4)

    x = jax.random.normal(kx, (B, N, FEATURES), dtype=jnp.float32)
    # adjacency: random 0/1 with self loops
    adj = (jax.random.uniform(kadj, (B, N, N)) > 0.5).astype(jnp.float32)
    adj = jnp.maximum(adj, jnp.eye(N, dtype=jnp.float32))

    # Deterministic parameter init (xavier-uniform-style scale).
    w_bound = (6.0 / (FEATURES + HIDDEN)) ** 0.5
    W = jax.random.uniform(kw, (FEATURES, HIDDEN), minval=-w_bound, maxval=w_bound,
                           dtype=jnp.float32)
    a_bound = (6.0 / (2 * HIDDEN + 1)) ** 0.5
    A = jax.random.uniform(ka, (2 * HIDDEN, 1), minval=-a_bound, maxval=a_bound,
                           dtype=jnp.float32)

    out = jax.block_until_ready(gat_encoder_forward(x, adj, W, A))
    assert out.shape == (B, HIDDEN)

    ref = jnp.stack([_reference_forward(x[b], adj[b], W, A) for b in range(B)])
    assert jnp.allclose(out, ref, atol=1e-4, rtol=1e-4), "mismatch vs JAX reference"

    # Single-graph path (matches the original module's forward signature).
    out0 = jax.block_until_ready(gat_encoder_forward(x[0], adj[0], W, A))
    assert out0.shape == (HIDDEN,)
    assert jnp.allclose(out0, ref[0], atol=1e-4, rtol=1e-4)

    print("KERNEL_OK")
</pallas_src>

<mosaic_0001>
module attributes {stable_mosaic.version = 11 : i64} {
  func.func @gat_encoder_kernel(%arg0: i32, %arg1: memref<1x16x128xf32, #tpu.memory_space<vmem>>, %arg2: memref<1x16x16xf32, #tpu.memory_space<vmem>>, %arg3: memref<128x128xf32, #tpu.memory_space<vmem>>, %arg4: memref<128x128xf32, #tpu.memory_space<vmem>>, %arg5: memref<2x16xf32, #tpu.memory_space<vmem>>, %arg6: memref<1x2x128xf32, #tpu.memory_space<vmem>>) attributes {dimension_semantics = [#tpu.dimension_semantics<parallel>], iteration_bounds = array<i64: 2>, scalar_prefetch = 0 : i64, scratch_operands = 0 : i64, tpu.core_type = #tpu.core_type<tc>, window_params = [{transform_indices = @transform_0, window_bounds = array<i64: 1, 16, 128>}, {transform_indices = @transform_1, window_bounds = array<i64: 1, 16, 16>}, {pipeline_mode = #tpu.pipeline_mode<synchronous>, transform_indices = @transform_2, window_bounds = array<i64: 128, 128>}, {pipeline_mode = #tpu.pipeline_mode<synchronous>, transform_indices = @transform_3, window_bounds = array<i64: 128, 128>}, {pipeline_mode = #tpu.pipeline_mode<synchronous>, transform_indices = @transform_4, window_bounds = array<i64: 2, 16>}, {transform_indices = @transform_5, window_bounds = array<i64: 1, 2, 128>}]} {
    %c0 = arith.constant 0 : index
    %c0_0 = arith.constant 0 : index
    %c0_1 = arith.constant 0 : index
    %0 = vector.load %arg1[%c0, %c0_0, %c0_1] : memref<1x16x128xf32, #tpu.memory_space<vmem>>, vector<1x16x128xf32>
    %1 = vector.shape_cast %0 : vector<1x16x128xf32> to vector<16x128xf32>
    %c0_2 = arith.constant 0 : index
    %c0_3 = arith.constant 0 : index
    %c0_4 = arith.constant 0 : index
    %2 = vector.load %arg2[%c0_2, %c0_3, %c0_4] : memref<1x16x16xf32, #tpu.memory_space<vmem>>, vector<1x16x16xf32>
    %3 = vector.shape_cast %2 : vector<1x16x16xf32> to vector<16x16xf32>
    %c0_5 = arith.constant 0 : index
    %c0_6 = arith.constant 0 : index
    %4 = vector.load %arg3[%c0_5, %c0_6] : memref<128x128xf32, #tpu.memory_space<vmem>>, vector<128x128xf32>
    %c0_7 = arith.constant 0 : index
    %c0_8 = arith.constant 0 : index
    %5 = vector.load %arg4[%c0_7, %c0_8] : memref<128x128xf32, #tpu.memory_space<vmem>>, vector<128x128xf32>
    %cst = arith.constant dense<0.000000e+00> : vector<16x128xf32>
    %6 = tpu.matmul %1, %4, %cst {dimension_numbers = #tpu.dot_dimension_numbers<[1], [0], [0], [1], [0, 0, 1, 1], [], []>} : vector<16x128xf32>, vector<128x128xf32>, vector<16x128xf32> -> vector<16x128xf32>
    %cst_9 = arith.constant dense<0.000000e+00> : vector<16x128xf32>
    %7 = tpu.matmul %6, %5, %cst_9 {dimension_numbers = #tpu.dot_dimension_numbers<[1], [0], [0], [1], [0, 0, 1, 1], [], []>} : vector<16x128xf32>, vector<128x128xf32>, vector<16x128xf32> -> vector<16x128xf32>
    %8 = vector.extract_strided_slice %7 {offsets = [0, 0], sizes = [16, 1], strides = [1, 1]} : vector<16x128xf32> to vector<16x1xf32>
    %9 = vector.extract_strided_slice %7 {offsets = [0, 1], sizes = [16, 1], strides = [1, 1]} : vector<16x128xf32> to vector<16x1xf32>
    %10 = tpu.transpose %9, [1, 0] : vector<16x1xf32> -> vector<1x16xf32>
    %11 = vector.broadcast %8 : vector<16x1xf32> to vector<16x16xf32>
    %12 = vector.broadcast %10 : vector<1x16xf32> to vector<16x16xf32>
    %13 = arith.addf %11, %12 : vector<16x16xf32>
    %cst_10 = arith.constant 0.000000e+00 : f32
    %14 = vector.broadcast %cst_10 : f32 to vector<16x16xf32>
    %15 = arith.cmpf ogt, %13, %14 : vector<16x16xf32>
    %cst_11 = arith.constant 2.000000e-01 : f32
    %16 = vector.broadcast %cst_11 : f32 to vector<16x16xf32>
    %17 = arith.mulf %16, %13 : vector<16x16xf32>
    %18 = arith.select %15, %13, %17 : vector<16x16xi1>, vector<16x16xf32>
    %cst_12 = arith.constant 0.000000e+00 : f32
    %19 = vector.broadcast %cst_12 : f32 to vector<16x16xf32>
    %20 = arith.cmpf ogt, %3, %19 : vector<16x16xf32>
    %cst_13 = arith.constant -9.000000e+15 : f32
    %21 = vector.broadcast %cst_13 : f32 to vector<16x16xf32>
    %22 = arith.select %20, %18, %21 : vector<16x16xi1>, vector<16x16xf32>
    %cst_14 = arith.constant dense<0xFF800000> : vector<16xf32>
    %23 = vector.multi_reduction <maximumf>, %22, %cst_14 [1] : vector<16x16xf32> to vector<16xf32>
    %24 = vector.shape_cast %23 : vector<16xf32> to vector<16x1xf32>
    %25 = vector.broadcast %24 : vector<16x1xf32> to vector<16x16xf32>
    %26 = arith.subf %22, %25 : vector<16x16xf32>
    %27 = math.exp %26 : vector<16x16xf32>
    %cst_15 = arith.constant dense<0.000000e+00> : vector<16xf32>
    %28 = vector.multi_reduction <add>, %27, %cst_15 [1] : vector<16x16xf32> to vector<16xf32>
    %29 = vector.shape_cast %28 : vector<16xf32> to vector<16x1xf32>
    %30 = tpu.reciprocal %29 : vector<16x1xf32> -> vector<16x1xf32>
    %31 = vector.broadcast %30 : vector<16x1xf32> to vector<16x16xf32>
    %32 = arith.mulf %27, %31 : vector<16x16xf32>
    %cst_16 = arith.constant dense<0.000000e+00> : vector<16x128xf32>
    %33 = tpu.matmul %32, %6, %cst_16 {dimension_numbers = #tpu.dot_dimension_numbers<[1], [0], [0], [1], [0, 0, 1, 1], [], []>} : vector<16x16xf32>, vector<16x128xf32>, vector<16x128xf32> -> vector<16x128xf32>
    %cst_17 = arith.constant 0.000000e+00 : f32
    %34 = vector.broadcast %cst_17 : f32 to vector<16x128xf32>
    %35 = arith.cmpf ogt, %33, %34 : vector<16x128xf32>
    %cst_18 = arith.constant 0.000000e+00 : f32
    %36 = vector.broadcast %cst_18 : f32 to vector<16x128xf32>
    %37 = arith.minimumf %33, %36 : vector<16x128xf32>
    %38 = math.exp %37 : vector<16x128xf32>
    %cst_19 = arith.constant 1.000000e+00 : f32
    %39 = vector.broadcast %cst_19 : f32 to vector<16x128xf32>
    %40 = arith.subf %38, %39 : vector<16x128xf32>
    %41 = arith.select %35, %33, %40 : vector<16x128xi1>, vector<16x128xf32>
    %cst_20 = arith.constant dense<0.000000e+00> : vector<16x128xf32>
    %42 = tpu.matmul %41, %4, %cst_20 {dimension_numbers = #tpu.dot_dimension_numbers<[1], [0], [0], [1], [0, 0, 1, 1], [], []>} : vector<16x128xf32>, vector<128x128xf32>, vector<16x128xf32> -> vector<16x128xf32>
    %cst_21 = arith.constant dense<0.000000e+00> : vector<16x128xf32>
    %43 = tpu.matmul %42, %5, %cst_21 {dimension_numbers = #tpu.dot_dimension_numbers<[1], [0], [0], [1], [0, 0, 1, 1], [], []>} : vector<16x128xf32>, vector<128x128xf32>, vector<16x128xf32> -> vector<16x128xf32>
    %44 = vector.extract_strided_slice %43 {offsets = [0, 0], sizes = [16, 1], strides = [1, 1]} : vector<16x128xf32> to vector<16x1xf32>
    %45 = vector.extract_strided_slice %43 {offsets = [0, 1], sizes = [16, 1], strides = [1, 1]} : vector<16x128xf32> to vector<16x1xf32>
    %46 = tpu.transpose %45, [1, 0] : vector<16x1xf32> -> vector<1x16xf32>
    %47 = vector.broadcast %44 : vector<16x1xf32> to vector<16x16xf32>
    %48 = vector.broadcast %46 : vector<1x16xf32> to vector<16x16xf32>
    %49 = arith.addf %47, %48 : vector<16x16xf32>
    %cst_22 = arith.constant 0.000000e+00 : f32
    %50 = vector.broadcast %cst_22 : f32 to vector<16x16xf32>
    %51 = arith.cmpf ogt, %49, %50 : vector<16x16xf32>
    %cst_23 = arith.constant 2.000000e-01 : f32
    %52 = vector.broadcast %cst_23 : f32 to vector<16x16xf32>
    %53 = arith.mulf %52, %49 : vector<16x16xf32>
    %54 = arith.select %51, %49, %53 : vector<16x16xi1>, vector<16x16xf32>
    %cst_24 = arith.constant 0.000000e+00 : f32
    %55 = vector.broadcast %cst_24 : f32 to vector<16x16xf32>
    %56 = arith.cmpf ogt, %3, %55 : vector<16x16xf32>
    %cst_25 = arith.constant -9.000000e+15 : f32
    %57 = vector.broadcast %cst_25 : f32 to vector<16x16xf32>
    %58 = arith.select %56, %54, %57 : vector<16x16xi1>, vector<16x16xf32>
    %cst_26 = arith.constant dense<0xFF800000> : vector<16xf32>
    %59 = vector.multi_reduction <maximumf>, %58, %cst_26 [1] : vector<16x16xf32> to vector<16xf32>
    %60 = vector.shape_cast %59 : vector<16xf32> to vector<16x1xf32>
    %61 = vector.broadcast %60 : vector<16x1xf32> to vector<16x16xf32>
    %62 = arith.subf %58, %61 : vector<16x16xf32>
    %63 = math.exp %62 : vector<16x16xf32>
    %cst_27 = arith.constant dense<0.000000e+00> : vector<16xf32>
    %64 = vector.multi_reduction <add>, %63, %cst_27 [1] : vector<16x16xf32> to vector<16xf32>
    %65 = vector.shape_cast %64 : vector<16xf32> to vector<16x1xf32>
    %66 = tpu.reciprocal %65 : vector<16x1xf32> -> vector<16x1xf32>
    %67 = vector.broadcast %66 : vector<16x1xf32> to vector<16x16xf32>
    %68 = arith.mulf %63, %67 : vector<16x16xf32>
    %cst_28 = arith.constant dense<0.000000e+00> : vector<16x128xf32>
    %69 = tpu.matmul %68, %42, %cst_28 {dimension_numbers = #tpu.dot_dimension_numbers<[1], [0], [0], [1], [0, 0, 1, 1], [], []>} : vector<16x16xf32>, vector<16x128xf32>, vector<16x128xf32> -> vector<16x128xf32>
    %c0_29 = arith.constant 0 : index
    %c0_30 = arith.constant 0 : index
    %70 = vector.load %arg5[%c0_29, %c0_30] : memref<2x16xf32, #tpu.memory_space<vmem>>, vector<2x16xf32>
    %cst_31 = arith.constant dense<0.000000e+00> : vector<2x128xf32>
    %71 = tpu.matmul %70, %69, %cst_31 {dimension_numbers = #tpu.dot_dimension_numbers<[1], [0], [0], [1], [0, 0, 1, 1], [], []>} : vector<2x16xf32>, vector<16x128xf32>, vector<2x128xf32> -> vector<2x128xf32>
    %c0_32 = arith.constant 0 : index
    %c0_33 = arith.constant 0 : index
    %c0_34 = arith.constant 0 : index
    %72 = vector.load %arg6[%c0_32, %c0_33, %c0_34] : memref<1x2x128xf32, #tpu.memory_space<vmem>>, vector<1x2x128xf32>
    %73 = vector.shape_cast %72 : vector<1x2x128xf32> to vector<2x128xf32>
    %74 = vector.shape_cast %71 : vector<2x128xf32> to vector<1x2x128xf32>
    tpu.vector_store %arg6[%c0_32, %c0_33, %c0_34], %74 {strides = array<i32>} : memref<1x2x128xf32, #tpu.memory_space<vmem>>, vector<1x2x128xf32>,
    return
  }
  func.func @transform_0(%arg0: i32) -> (i32, i32, i32) {
    %c0_i32 = arith.constant 0 : i32
    %c0_i32_0 = arith.constant 0 : i32
    %c0_i32_1 = arith.constant 0 : i32
    return %arg0, %c0_i32, %c0_i32_0 : i32, i32, i32
  }
  func.func @transform_1(%arg0: i32) -> (i32, i32, i32) {
    %c0_i32 = arith.constant 0 : i32
    %c0_i32_0 = arith.constant 0 : i32
    %c0_i32_1 = arith.constant 0 : i32
    return %arg0, %c0_i32, %c0_i32_0 : i32, i32, i32
  }
  func.func @transform_2(%arg0: i32) -> (i32, i32) {
    %c0_i32 = arith.constant 0 : i32
    %c0_i32_0 = arith.constant 0 : i32
    %c0_i32_1 = arith.constant 0 : i32
    return %c0_i32, %c0_i32_0 : i32, i32
  }
  func.func @transform_3(%arg0: i32) -> (i32, i32) {
    %c0_i32 = arith.constant 0 : i32
    %c0_i32_0 = arith.constant 0 : i32
    %c0_i32_1 = arith.constant 0 : i32
    return %c0_i32, %c0_i32_0 : i32, i32
  }
  func.func @transform_4(%arg0: i32) -> (i32, i32) {
    %c0_i32 = arith.constant 0 : i32
    %c0_i32_0 = arith.constant 0 : i32
    %c0_i32_1 = arith.constant 0 : i32
    return %c0_i32, %c0_i32_0 : i32, i32
  }
  func.func @transform_5(%arg0: i32) -> (i32, i32, i32) {
    %c0_i32 = arith.constant 0 : i32
    %c0_i32_0 = arith.constant 0 : i32
    %c0_i32_1 = arith.constant 0 : i32
    return %arg0, %c0_i32, %c0_i32_0 : i32, i32, i32
  }
}

</mosaic_0001>

<llo_original>
// kernel: tpu_custom_call.1
$region0: #{tpu_custom_call.1}
  #allocation0 [shape = 'u32[]', space=smem, size = 0x4, offset = 0x4, fixed_abs, tag = 'smem constant byte address 0x4 - core index']
  #allocation1 [shape = 'u32[72,128]{1,0:T(1,128)}', space=vmem, size = 0x9000, scoped, tag = 'internal scratch']
  %s0 = inlined_call_operand.hbm [shape: f32[2,16,128], index: 0, kind: input, shape index: {}]
  %s1 = inlined_call_operand.hbm [shape: f32[2,16,16], index: 1, kind: input, shape index: {}]
  %s2 = inlined_call_operand.hbm [shape: f32[128,128], index: 2, kind: input, shape index: {}]
  %s3 = inlined_call_operand.hbm [shape: f32[128,128], index: 3, kind: input, shape index: {}]
  %s4 = inlined_call_operand.vmem [shape: f32[2,16], index: 4, kind: input, shape index: {}]
  %s5 = inlined_call_operand.hbm [shape: f32[2,2,128], index: 5, kind: output, shape index: {}]
  %s6 = sld [smem:[#allocation0]]
  $region69: #{tpu_custom_call.1} parent=0
    _
  %s8 = ssub.s32 1, %s6
  %s9 = scalar_select 0, %s8, %s6
  $region1: #{tpu_custom_call.1} parent=0
    #allocation2 [shape = 'u8[16384]{0}', space=vmem, size = 0x4000, scoped, tag = 'input window, operand 0']
    #allocation3 [shape = 's32[2]{0}', space=sflag, size = 0x8, scoped, tag = 'scoped memory for tpu_custom_call.1']
    #allocation4 [shape = 's32[2]{0}', space=sflag, size = 0x8, scoped, tag = 'scoped memory for tpu_custom_call.1']
    #allocation5 [shape = 'u8[16384]{0}', space=vmem, size = 0x4000, scoped, tag = 'input window, operand 1']
    #allocation6 [shape = 's32[2]{0}', space=sflag, size = 0x8, scoped, tag = 'scoped memory for tpu_custom_call.1']
    #allocation7 [shape = 'u8[65536]{0}', space=vmem, size = 0x10000, scoped, tag = 'input window, operand 2, single buffered']
    #allocation8 [shape = 'u8[65536]{0}', space=vmem, size = 0x10000, scoped, tag = 'input window, operand 3, single buffered']
    #allocation9 [shape = 's32[1]{0}', space=sflag, size = 0x4, scoped, tag = 'scoped memory for tpu_custom_call.1']
    #allocation10 [shape = 'u8[2048]{0}', space=vmem, size = 0x800, scoped, tag = 'output window, operand 0']
    %10 = vsyncpa [#allocation3], 0
    %s11 = scalar_lea.sflag [#allocation3], 1
    %12 = vsyncpa %s11, 0
    %13 = vsyncpa [#allocation6], 0
    %s14 = scalar_lea.sflag [#allocation6], 1
    %15 = vsyncpa %s14, 0
    %16 = vsyncpa [#allocation9], 0
    %17 = vsyncpa [#allocation4], 0
    %s18 = scalar_lea.sflag [#allocation4], 1
    %19 = vsyncpa %s18, 0
    loop: start=0, step=1, limit=4
    $region2: #{tpu_custom_call.1} parent=1 // loop_pre_header
      _
    $region3: #{tpu_custom_call.1} parent=1 // loop_header
      %s21 = sphi 0, %s25
      %p22 = scmp.ge.s32.totalorder %s21, 4
      %s31 = sphi 0, %s33
      %s34 = sphi 0, %s31
      %s35 = sphi 0, %s34
      %s51 = sphi 0, %s35
      %s57 = sphi 0, %s59
      %s60 = sphi 0, %s57
      %s61 = sphi 0, %s60
      %s77 = sphi 0, %s61
      %s81 = sphi 0, %s81
      %s83 = sphi 0, %s81
      %s84 = sphi 0, %s83
      %s98 = sphi 0, %s84
      %s102 = sphi 0, %s102
      %s104 = sphi 0, %s102
      %s105 = sphi 0, %s104
      %s119 = sphi 0, %s105
      %s123 = sphi 0, %s123
      %s125 = sphi 0, %s123
      %s126 = sphi 0, %s125
      %s140 = sphi 0, %s126
      %s146 = sphi 0, %s148
      %s149 = sphi 0, %s146
      %s150 = sphi 0, %s149
      %s166 = sphi 0, %s150
    $region4: #{tpu_custom_call.1} parent=1 // loop_header_branch
      %24 = sbr.rel (%p22) target = $region8
    $region5: #{tpu_custom_call.1} parent=1 // loop_body
      %s26 = ssub.s32 %s21, 1
      %s27 = ssub.s32 %s21, 2
      %s28 = sadd.s32 %s21, 1
      %s29 = ssub.s32 %s21, %s28
      %p30 = scmp.eq.s32.totalorder %s29, 0
      %s32 = sadd.s32 %s31, 1
      %s33 = scalar_select %p30, %s31, %s32
      %p36 = pneg %p30
      %p37 = scmp.eq.s32.totalorder %s21, 1
      %p38 = por %p36, %p37
      %p39 = scmp.ne.s32.totalorder %s31, %s34
      %p40 = scmp.eq.s32.totalorder %s21, 0
      %p41 = por %p39, %p40
      %p42 = scmp.ne.s32.totalorder %s31, %s34
      %p43 = scmp.eq.s32.totalorder %s26, 1
      %p44 = por %p42, %p43
      %p45 = scmp.ne.s32.totalorder %s34, %s35
      %p46 = scmp.eq.s32.totalorder %s26, 0
      %p47 = por %p45, %p46
      %p48 = scmp.ne.s32.totalorder %s34, %s35
      %p49 = scmp.eq.s32.totalorder %s27, 1
      %p50 = por %p48, %p49
      %p52 = scmp.ne.s32.totalorder %s35, %s51
      %p53 = scmp.eq.s32.totalorder %s27, 0
      %p54 = por %p52, %p53
      %s55 = ssub.s32 %s21, %s28
      %p56 = scmp.eq.s32.totalorder %s55, 0
      %s58 = sadd.s32 %s57, 1
      %s59 = scalar_select %p56, %s57, %s58
      %p62 = pneg %p56
      %p63 = scmp.eq.s32.totalorder %s21, 1
      %p64 = por %p62, %p63
      %p65 = scmp.ne.s32.totalorder %s57, %s60
      %p66 = scmp.eq.s32.totalorder %s21, 0
      %p67 = por %p65, %p66
      %p68 = scmp.ne.s32.totalorder %s57, %s60
      %p69 = scmp.eq.s32.totalorder %s26, 1
      %p70 = por %p68, %p69
      %p71 = scmp.ne.s32.totalorder %s60, %s61
      %p72 = scmp.eq.s32.totalorder %s26, 0
      %p73 = por %p71, %p72
      %p74 = scmp.ne.s32.totalorder %s60, %s61
      %p75 = scmp.eq.s32.totalorder %s27, 1
      %p76 = por %p74, %p75
      %p78 = scmp.ne.s32.totalorder %s61, %s77
      %p79 = scmp.eq.s32.totalorder %s27, 0
      %p80 = por %p78, %p79
      %s82 = sadd.s32 %s81, 1
      %p85 = scmp.eq.s32.totalorder %s21, 1
      %p86 = scmp.ne.s32.totalorder %s81, %s83
      %p87 = scmp.eq.s32.totalorder %s21, 0
      %p88 = por %p86, %p87
      %p89 = scmp.ne.s32.totalorder %s81, %s83
      %p90 = scmp.eq.s32.totalorder %s26, 1
      %p91 = por %p89, %p90
      %p92 = scmp.ne.s32.totalorder %s83, %s84
      %p93 = scmp.eq.s32.totalorder %s26, 0
      %p94 = por %p92, %p93
      %p95 = scmp.ne.s32.totalorder %s83, %s84
      %p96 = scmp.eq.s32.totalorder %s27, 1
      %p97 = por %p95, %p96
      %p99 = scmp.ne.s32.totalorder %s84, %s98
      %p100 = scmp.eq.s32.totalorder %s27, 0
      %p101 = por %p99, %p100
      %s103 = sadd.s32 %s102, 1
      %p106 = scmp.eq.s32.totalorder %s21, 1
      %p107 = scmp.ne.s32.totalorder %s102, %s104
      %p108 = scmp.eq.s32.totalorder %s21, 0
      %p109 = por %p107, %p108
      %p110 = scmp.ne.s32.totalorder %s102, %s104
      %p111 = scmp.eq.s32.totalorder %s26, 1
      %p112 = por %p110, %p111
      %p113 = scmp.ne.s32.totalorder %s104, %s105
      %p114 = scmp.eq.s32.totalorder %s26, 0
      %p115 = por %p113, %p114
      %p116 = scmp.ne.s32.totalorder %s104, %s105
      %p117 = scmp.eq.s32.totalorder %s27, 1
      %p118 = por %p116, %p117
      %p120 = scmp.ne.s32.totalorder %s105, %s119
      %p121 = scmp.eq.s32.totalorder %s27, 0
      %p122 = por %p120, %p121
      %s124 = sadd.s32 %s123, 1
      %p127 = scmp.eq.s32.totalorder %s21, 1
      %p128 = scmp.ne.s32.totalorder %s123, %s125
      %p129 = scmp.eq.s32.totalorder %s21, 0
      %p130 = por %p128, %p129
      %p131 = scmp.ne.s32.totalorder %s123, %s125
      %p132 = scmp.eq.s32.totalorder %s26, 1
      %p133 = por %p131, %p132
      %p134 = scmp.ne.s32.totalorder %s125, %s126
      %p135 = scmp.eq.s32.totalorder %s26, 0
      %p136 = por %p134, %p135
      %p137 = scmp.ne.s32.totalorder %s125, %s126
      %p138 = scmp.eq.s32.totalorder %s27, 1
      %p139 = por %p137, %p138
      %p141 = scmp.ne.s32.totalorder %s126, %s140
      %p142 = scmp.eq.s32.totalorder %s27, 0
      %p143 = por %p141, %p142
      %s144 = ssub.s32 %s21, %s28
      %p145 = scmp.eq.s32.totalorder %s144, 0
      %s147 = sadd.s32 %s146, 1
      %s148 = scalar_select %p145, %s146, %s147
      %p151 = pneg %p145
      %p152 = scmp.eq.s32.totalorder %s21, 1
      %p153 = por %p151, %p152
      %p154 = scmp.ne.s32.totalorder %s146, %s149
      %p155 = scmp.eq.s32.totalorder %s21, 0
      %p156 = por %p154, %p155
      %p157 = scmp.ne.s32.totalorder %s146, %s149
      %p158 = scmp.eq.s32.totalorder %s26, 1
      %p159 = por %p157, %p158
      %p160 = scmp.ne.s32.totalorder %s149, %s150
      %p161 = scmp.eq.s32.totalorder %s26, 0
      %p162 = por %p160, %p161
      %p163 = scmp.ne.s32.totalorder %s149, %s150
      %p164 = scmp.eq.s32.totalorder %s27, 1
      %p165 = por %p163, %p164
      %p167 = scmp.ne.s32.totalorder %s150, %s166
      %p168 = scmp.eq.s32.totalorder %s27, 0
      %p169 = por %p167, %p168
      %p170 = scmp.le.s32.totalorder 1, %s21
      %p171 = scmp.lt.s32.totalorder %s21, 3
      %p172 = pnand %p170, %p171
      %p173 = pneg %p172
      // Predicated region
      $region9: #{tpu_custom_call.1} parent=5 // pred_check
        _
      $region10: #{tpu_custom_call.1} parent=5 // pred_check_branch
        %175 = sbr.rel (%p172) target = $region12
      $region11: #{tpu_custom_call.1} parent=5 // pred_region
        %s176 = ssub.s32 %s21, 1
        // Predicated region
        $region13: #{tpu_custom_call.1} parent=11 // pred_check
          %p177 = pneg %p94
        $region14: #{tpu_custom_call.1} parent=11 // pred_check_branch
          %179 = sbr.rel (%p177) target = $region16
        $region15: #{tpu_custom_call.1} parent=11 // pred_region
          %181 = vsyncadd [#allocation6], 0
          %s182 = sshll.u32 %s2, 4
          %s183 = int_to_ptr.hbm [resolvable:$true] %s182
          %s184 = sshll.u32 [#allocation7], 4
          %s185 = int_to_ptr.vmem [resolvable:$true] %s184
          %190 = dma.hbm_to_vmem [thread:$0]  %s183, 2048, %s185, [#allocation6], 128, 128, 8
        $region16: #{tpu_custom_call.1} parent=11 // pred_fallthru
          _
        // Predicated region
        $region17: #{tpu_custom_call.1} parent=11 // pred_check
          %p191 = pneg %p115
        $region18: #{tpu_custom_call.1} parent=11 // pred_check_branch
          %193 = sbr.rel (%p191) target = $region20
        $region19: #{tpu_custom_call.1} parent=11 // pred_region
          %195 = vsyncadd [#allocation9], 0
          %s196 = sshll.u32 %s3, 4
          %s197 = int_to_ptr.hbm [resolvable:$true] %s196
          %s198 = sshll.u32 [#allocation8], 4
          %s199 = int_to_ptr.vmem [resolvable:$true] %s198
          %204 = dma.hbm_to_vmem [thread:$0]  %s197, 2048, %s199, [#allocation9], 128, 128, 8
        $region20: #{tpu_custom_call.1} parent=11 // pred_fallthru
          _
        // Predicated region
        $region21: #{tpu_custom_call.1} parent=11 // pred_check
          %p205 = pneg %p136
        $region22: #{tpu_custom_call.1} parent=11 // pred_check_branch
          %207 = sbr.rel (%p205) target = $region24
        $region23: #{tpu_custom_call.1} parent=11 // pred_region
          _
        $region24: #{tpu_custom_call.1} parent=11 // pred_fallthru
          _
      $region12: #{tpu_custom_call.1} parent=5 // pred_fallthru
        _
      %p208 = scmp.lt.s32.totalorder %s21, 2
      // Predicated region
      $region25: #{tpu_custom_call.1} parent=5 // pred_check
        %p209 = pneg %p208
      $region26: #{tpu_custom_call.1} parent=5 // pred_check_branch
        %211 = sbr.rel (%p209) target = $region28
      $region27: #{tpu_custom_call.1} parent=5 // pred_region
        // Predicated region
        $region29: #{tpu_custom_call.1} parent=27 // pred_check
          %p212 = pneg %p41
        $region30: #{tpu_custom_call.1} parent=27 // pred_check_branch
          %214 = sbr.rel (%p212) target = $region32
        $region31: #{tpu_custom_call.1} parent=27 // pred_region
          %s215 = sand.u32 %s31, 1
          %s216 = scalar_lea.sflag [#allocation3], %s215
          %s217 = sand.u32 %s31, 1
          %s218 = smul.addr %s217, 16
          %s219 = scalar_lea.vmem [#allocation2], %s218
          %221 = vsyncadd %s216, 0
          %s222 = smul.addr %s21, 2
          %s223 = smul.addr %s222, 8
          %s224 = scalar_lea.hbm %s0, %s223
          %s225 = sshll.u32 %s224, 4
          %s226 = int_to_ptr.hbm [resolvable:$true] %s225
          %s227 = sshll.u32 %s219, 4
          %s228 = int_to_ptr.vmem [resolvable:$true] %s227
          %233 = dma.hbm_to_vmem [thread:$0]  %s226, 256, %s228, %s216, 128, 128, 8
        $region32: #{tpu_custom_call.1} parent=27 // pred_fallthru
          _
        // Predicated region
        $region33: #{tpu_custom_call.1} parent=27 // pred_check
          %p234 = pneg %p67
        $region34: #{tpu_custom_call.1} parent=27 // pred_check_branch
          %236 = sbr.rel (%p234) target = $region36
        $region35: #{tpu_custom_call.1} parent=27 // pred_region
          %s237 = sand.u32 %s21, 1
          %s238 = scalar_lea.sflag [#allocation6], %s237
          %s239 = sand.u32 %s57, 1
          %s240 = smul.addr %s239, 16
          %s241 = scalar_lea.vmem [#allocation5], %s240
          %243 = vsyncadd %s238, 0
          %s244 = smul.addr %s21, 2
          %s245 = smul.addr %s244, 8
          %s246 = scalar_lea.hbm %s1, %s245
          %s247 = sshll.u32 %s246, 4
          %s248 = int_to_ptr.hbm [resolvable:$true] %s247
          %s249 = sshll.u32 %s241, 4
          %s250 = int_to_ptr.vmem [resolvable:$true] %s249
          %255 = dma.hbm_to_vmem [thread:$0]  %s248, 256, %s250, %s238, 128, 128, 8
        $region36: #{tpu_custom_call.1} parent=27 // pred_fallthru
          _
      $region28: #{tpu_custom_call.1} parent=5 // pred_fallthru
        _
      %p256 = scmp.le.s32.totalorder 1, %s21
      %p257 = scmp.lt.s32.totalorder %s21, 3
      %p258 = pnand %p256, %p257
      %p259 = pneg %p258
      // Predicated region
      $region37: #{tpu_custom_call.1} parent=5 // pred_check
        _
      $region38: #{tpu_custom_call.1} parent=5 // pred_check_branch
        %261 = sbr.rel (%p258) target = $region40
      $region39: #{tpu_custom_call.1} parent=5 // pred_region
        %s262 = ssub.s32 %s21, 1
        %s263 = sand.u32 %s34, 1
        %s264 = scalar_lea.sflag [#allocation3], %s263
        %s265 = sand.u32 %s34, 1
        %s266 = smul.addr %s265, 16
        %s267 = scalar_lea.vmem [#allocation2], %s266
        // Predicated region
        $region41: #{tpu_custom_call.1} parent=39 // pred_check
          %p268 = pneg %p47
        $region42: #{tpu_custom_call.1} parent=39 // pred_check_branch
          %270 = sbr.rel (%p268) target = $region44
        $region43: #{tpu_custom_call.1} parent=39 // pred_region
          %272 = dma.done %s264, 256
        $region44: #{tpu_custom_call.1} parent=39 // pred_fallthru
          _
        %s273 = sand.u32 %s26, 1
        %s274 = scalar_lea.sflag [#allocation6], %s273
        %s275 = sand.u32 %s60, 1
        %s276 = smul.addr %s275, 16
        %s277 = scalar_lea.vmem [#allocation5], %s276
        // Predicated region
        $region45: #{tpu_custom_call.1} parent=39 // pred_check
          %p278 = pneg %p73
        $region46: #{tpu_custom_call.1} parent=39 // pred_check_branch
          %280 = sbr.rel (%p278) target = $region48
        $region47: #{tpu_custom_call.1} parent=39 // pred_region
          %282 = dma.done %s274, 256
        $region48: #{tpu_custom_call.1} parent=39 // pred_fallthru
          _
        // Predicated region
        $region49: #{tpu_custom_call.1} parent=39 // pred_check
          %p283 = pneg %p94
        $region50: #{tpu_custom_call.1} parent=39 // pred_check_branch
          %285 = sbr.rel (%p283) target = $region52
        $region51: #{tpu_custom_call.1} parent=39 // pred_region
          %287 = dma.done [#allocation6], 2048
        $region52: #{tpu_custom_call.1} parent=39 // pred_fallthru
          _
        // Predicated region
        $region53: #{tpu_custom_call.1} parent=39 // pred_check
          %p288 = pneg %p115
        $region54: #{tpu_custom_call.1} parent=39 // pred_check_branch
          %290 = sbr.rel (%p288) target = $region56
        $region55: #{tpu_custom_call.1} parent=39 // pred_region
          %292 = dma.done [#allocation9], 2048
        $region56: #{tpu_custom_call.1} parent=39 // pred_fallthru
          _
        %s293 = sand.u32 %s34, 1
        %s294 = scalar_lea.sflag [#allocation3], %s293
        %s295 = sand.u32 %s34, 1
        %s296 = smul.addr %s295, 16
        %s297 = scalar_lea.vmem [#allocation2], %s296
        %p298 = pneg %p47
        %p299 = pneg %p44
        %s300 = sand.u32 %s26, 1
        %s301 = scalar_lea.sflag [#allocation6], %s300
        %s302 = sand.u32 %s60, 1
        %s303 = smul.addr %s302, 16
        %s304 = scalar_lea.vmem [#allocation5], %s303
        %p305 = pneg %p73
        %p306 = pneg %p70
        %p307 = pneg %p94
        %p308 = pneg %p91
        %p309 = pneg %p115
        %p310 = pneg %p112
        %p311 = pneg %p136
        %p312 = pneg %p133
        %p313 = pneg %p162
        %p314 = pneg %p159
        %s315 = sand.u32 %s149, 1
        %s316 = scalar_lea.sflag [#allocation4], %s315
        %s317 = sand.u32 %s149, 1
        %s318 = smul.addr %s317, 2
        %s319 = scalar_lea.vmem [#allocation10], %s318
        %v320 = vld [vmem:[%s267] sm:$0xff]
        %v321 = vld [vmem:[%s267 + $0x8] sm:$0xff]
        %v322 = vld [vmem:[%s277] sm:$0xff]
        %v323 = vld [vmem:[%s277 + $0x8] sm:$0xff]
        %v324 = vld [vmem:[#allocation7] sm:$0xff]
        %v325 = vld [vmem:[#allocation7 + $0x8] sm:$0xff]
        %v326 = vld [vmem:[#allocation7 + $0x10] sm:$0xff]
        %v327 = vld [vmem:[#allocation7 + $0x18] sm:$0xff]
        %v328 = vld [vmem:[#allocation7 + $0x20] sm:$0xff]
        %v329 = vld [vmem:[#allocation7 + $0x28] sm:$0xff]
        %v330 = vld [vmem:[#allocation7 + $0x30] sm:$0xff]
        %v331 = vld [vmem:[#allocation7 + $0x38] sm:$0xff]
        %v332 = vld [vmem:[#allocation7 + $0x40] sm:$0xff]
        %v333 = vld [vmem:[#allocation7 + $0x48] sm:$0xff]
        %v334 = vld [vmem:[#allocation7 + $0x50] sm:$0xff]
        %v335 = vld [vmem:[#allocation7 + $0x58] sm:$0xff]
        %v336 = vld [vmem:[#allocation7 + $0x60] sm:$0xff]
        %v337 = vld [vmem:[#allocation7 + $0x68] sm:$0xff]
        %v338 = vld [vmem:[#allocation7 + $0x70] sm:$0xff]
        %v339 = vld [vmem:[#allocation7 + $0x78] sm:$0xff]
        %v340 = vld [vmem:[#allocation8] sm:$0xff]
        %v341 = vld [vmem:[#allocation8 + $0x8] sm:$0xff]
        %v342 = vld [vmem:[#allocation8 + $0x10] sm:$0xff]
        %v343 = vld [vmem:[#allocation8 + $0x18] sm:$0xff]
        %v344 = vld [vmem:[#allocation8 + $0x20] sm:$0xff]
        %v345 = vld [vmem:[#allocation8 + $0x28] sm:$0xff]
        %v346 = vld [vmem:[#allocation8 + $0x30] sm:$0xff]
        %v347 = vld [vmem:[#allocation8 + $0x38] sm:$0xff]
        %v348 = vld [vmem:[#allocation8 + $0x40] sm:$0xff]
        %v349 = vld [vmem:[#allocation8 + $0x48] sm:$0xff]
        %v350 = vld [vmem:[#allocation8 + $0x50] sm:$0xff]
        %v351 = vld [vmem:[#allocation8 + $0x58] sm:$0xff]
        %v352 = vld [vmem:[#allocation8 + $0x60] sm:$0xff]
        %v353 = vld [vmem:[#allocation8 + $0x68] sm:$0xff]
        %v354 = vld [vmem:[#allocation8 + $0x70] sm:$0xff]
        %v355 = vld [vmem:[#allocation8 + $0x78] sm:$0xff]
        %356 = vmatpush.msra.mxu0 %v339
        %357 = vmatpush.msra.mxu0 %v338
        %358 = vmatpush.msra.mxu0 %v337
        %359 = vmatpush.msra.mxu0 %v336
        %360 = vmatpush.msra.mxu0 %v335
        %361 = vmatpush.msra.mxu0 %v334
        %362 = vmatpush.msra.mxu0 %v333
        %363 = vmatpush.msra.mxu0 %v332
        %364 = vmatpush.msra.mxu0 %v331
        %365 = vmatpush.msra.mxu0 %v330
        %366 = vmatpush.msra.mxu0 %v329
        %367 = vmatpush.msra.mxu0 %v328
        %368 = vmatpush.msra.mxu0 %v327
        %369 = vmatpush.msra.mxu0 %v326
        %370 = vmatpush.msra.mxu0 %v325
        %371 = vmatpush.msra.mxu0 %v324
        %372 = vmatmul.f32.gmra.mxu0 %v320
        %v373 = vpop.f32.mrf.mxu0
        %v374 = vadd.f32 0.0, %v373
        %375 = vmatmul.f32.gmra.mxu0 %v321
        %v376 = vpop.f32.mrf.mxu0
        %v377 = vadd.f32 0.0, %v376
        %378 = vdwg.mxu0
        %379 = vmatpush.msra.mxu0 %v355
        %380 = vmatpush.msra.mxu0 %v354
        %381 = vmatpush.msra.mxu0 %v353
        %382 = vmatpush.msra.mxu0 %v352
        %383 = vmatpush.msra.mxu0 %v351
        %384 = vmatpush.msra.mxu0 %v350
        %385 = vmatpush.msra.mxu0 %v349
        %386 = vmatpush.msra.mxu0 %v348
        %387 = vmatpush.msra.mxu0 %v347
        %388 = vmatpush.msra.mxu0 %v346
        %389 = vmatpush.msra.mxu0 %v345
        %390 = vmatpush.msra.mxu0 %v344
        %391 = vmatpush.msra.mxu0 %v343
        %392 = vmatpush.msra.mxu0 %v342
        %393 = vmatpush.msra.mxu0 %v341
        %394 = vmatpush.msra.mxu0 %v340
        %395 = vmatmul.f32.gmra.mxu0 %v374
        %v396 = vpop.f32.mrf.mxu0
        %v397 = vadd.f32 0.0, %v396
        %398 = vmatmul.f32.gmra.mxu0 %v377
        %v399 = vpop.f32.mrf.mxu0
        %v400 = vadd.f32 0.0, %v399
        %401 = vdwg.mxu0
        %404 = vrot.lane.b32.xlu0 %v397, 127
        %v405 = vpop.permute.xlu0 %404
        %406 = vrot.lane.b32.xlu0 %v400, 127
        %v407 = vpop.permute.xlu0 %406
        %410 = vxpose.xlu0.b32.start [1/16] %v405, 128
        %411 = vxpose.xlu0.b32.cont [2/16] %v407, 128
        %412 = vxpose.xlu0.b32.cont [3/16] 0.0, 128
        %413 = vxpose.xlu0.b32.cont [4/16] 0.0, 128
        %414 = vxpose.xlu0.b32.cont [5/16] 0.0, 128
        %415 = vxpose.xlu0.b32.cont [6/16] 0.0, 128
        %416 = vxpose.xlu0.b32.cont [7/16] 0.0, 128
        %417 = vxpose.xlu0.b32.cont [8/16] 0.0, 128
        %418 = vxpose.xlu0.b32.cont [9/16] 0.0, 128
        %419 = vxpose.xlu0.b32.cont [10/16] 0.0, 128
        %420 = vxpose.xlu0.b32.cont [11/16] 0.0, 128
        %421 = vxpose.xlu0.b32.cont [12/16] 0.0, 128
        %422 = vxpose.xlu0.b32.cont [13/16] 0.0, 128
        %423 = vxpose.xlu0.b32.cont [14/16] 0.0, 128
        %424 = vxpose.xlu0.b32.cont [15/16] 0.0, 128
        %425 = vxpose.xlu0.b32.end [16/16] 0.0, 128
        %v426 = vpop.trf.xlu0
        %v427 = vpop.trf.xlu0
        %v428 = vpop.trf.xlu0
        %v429 = vpop.trf.xlu0
        %v430 = vpop.trf.xlu0
        %v431 = vpop.trf.xlu0
        %v432 = vpop.trf.xlu0
        %v433 = vpop.trf.xlu0
        %v434 = vpop.trf.xlu0
        %v435 = vpop.trf.xlu0
        %v436 = vpop.trf.xlu0
        %v437 = vpop.trf.xlu0
        %v438 = vpop.trf.xlu0
        %v439 = vpop.trf.xlu0
        %v440 = vpop.trf.xlu0
        %v441 = vpop.trf.xlu0
        %442 = vset.pattern.permute.xlu0 0
        %443 = vperm.xlu0 %442, %v397
        %v444 = vpop.permute.xlu0 %443
        %446 = vset.pattern.permute.xlu0 0
        %447 = vperm.xlu0 %446, %v400
        %v448 = vpop.permute.xlu0 %447
        %v450 = vperm.slane %v426, 0
        %v451 = vadd.f32 %v444, %v450
        %v452 = vadd.f32 %v448, %v450
        %vm453 = vcmp.gt.f32.partialorder %v451, 0.0
        %vm454 = vcmp.gt.f32.partialorder %v452, 0.0
        %v455 = vmul.f32 %v451, 0.2
        %v456 = vmul.f32 %v452, 0.2
        %v457 = vsel %vm453, %v451, %v455
        %v458 = vsel %vm454, %v452, %v456
        %vm459 = vcmp.gt.f32.partialorder %v322, 0.0
        %vm460 = vcmp.gt.f32.partialorder %v323, 0.0
        %v461 = vsel %vm459, %v457, -9e+15
        %v462 = vsel %vm460, %v458, -9e+15
        %vm463 = vcmask 130048
        %v464 = vsel %vm463, %v461, -inf
        %465 = vmax.xlane.f32.xlu0 %v464
        %v466 = vpop.xlane.xlu0 %465
        %v467 = vsel %vm463, %v462, -inf
        %468 = vmax.xlane.f32.xlu0 %v467
        %v469 = vpop.xlane.xlu0 %468
        %v470 = vsub.f32 %v461, %v466
        %v471 = vsub.f32 %v462, %v469
        %v472 = vmul.f32 %v470, 1.442695
        %v473 = vpow.pop %v472
        %v474 = vmul.f32 %v471, 1.442695
        %v475 = vpow.pop %v474
        %v476 = vsel %vm463, %v473, 0.0
        %477 = vadd.xlane.f32.xlu0 %v476
        %v478 = vpop.xlane.xlu0 %477
        %v479 = vsel %vm463, %v475, 0.0
        %480 = vadd.xlane.f32.xlu0 %v479
        %v481 = vpop.xlane.xlu0 %480
        %v482 = vrcp.pop %v478
        %v483 = vmul.f32 %v478, %v482
        %v484 = vsub.f32 1.0, %v483
        %v485 = vmul.f32 %v482, %v484
        %v486 = vadd.f32 %v482, %v485
        %vm487 = vweird.f32 %v478
        %vm488 = vweird.f32 %v482
        %vm489 = vmor %vm487, %vm488
        %v490 = vsel %vm489, %v482, %v486
        %v491 = vand.u32 2147483647, %v478
        %vm492 = vcmp.eq.f32.partialorder %v491, 8.507059e+37
        %v493 = vand.u32 %v478, 2147483648
        %v494 = vor.u32 1.1754944e-38, %v493
        %v495 = vsel %vm492, %v494, %v490
        %v496 = vrcp.pop %v481
        %v497 = vmul.f32 %v481, %v496
        %v498 = vsub.f32 1.0, %v497
        %v499 = vmul.f32 %v496, %v498
        %v500 = vadd.f32 %v496, %v499
        %vm501 = vweird.f32 %v481
        %vm502 = vweird.f32 %v496
        %vm503 = vmor %vm501, %vm502
        %v504 = vsel %vm503, %v496, %v500
        %v505 = vand.u32 2147483647, %v481
        %vm506 = vcmp.eq.f32.partialorder %v505, 8.507059e+37
        %v507 = vand.u32 %v481, 2147483648
        %v508 = vor.u32 1.1754944e-38, %v507
        %v509 = vsel %vm506, %v508, %v504
        %v510 = vmul.f32 %v473, %v495
        %v511 = vmul.f32 %v475, %v509
        %v513 = vsel %vm463, %v510, 0
        %v516 = vsel %vm463, %v511, 0
        %518 = vmatpush.msra.mxu0 0.0
        %519 = vmatpush.msra.mxu0 0.0
        %520 = vmatpush.msra.mxu0 0.0
        %521 = vmatpush.msra.mxu0 0.0
        %522 = vmatpush.msra.mxu0 0.0
        %523 = vmatpush.msra.mxu0 0.0
        %524 = vmatpush.msra.mxu0 0.0
        %525 = vmatpush.msra.mxu0 0.0
        %526 = vmatpush.msra.mxu0 0.0
        %527 = vmatpush.msra.mxu0 0.0
        %528 = vmatpush.msra.mxu0 0.0
        %529 = vmatpush.msra.mxu0 0.0
        %530 = vmatpush.msra.mxu0 0.0
        %531 = vmatpush.msra.mxu0 0.0
        %532 = vmatpush.msra.mxu0 %v377
        %533 = vmatpush.msra.mxu0 %v374
        %534 = vmatmul.f32.gmra.mxu0 %v513
        %v535 = vpop.f32.mrf.mxu0
        %v536 = vadd.f32 0.0, %v535
        %537 = vmatmul.f32.gmra.mxu0 %v516
        %v538 = vpop.f32.mrf.mxu0
        %v539 = vadd.f32 0.0, %v538
        %540 = vdwg.mxu0
        %vm541 = vcmp.gt.f32.partialorder %v536, 0.0
        %vm542 = vcmp.gt.f32.partialorder %v539, 0.0
        %v543 = vmin.f32 %v536, 0.0
        %v544 = vmin.f32 %v539, 0.0
        %v545 = vmul.f32 %v543, 1.442695
        %v546 = vpow.pop %v545
        %v547 = vmul.f32 %v544, 1.442695
        %v548 = vpow.pop %v547
        %v549 = vsub.f32 %v546, 1.0
        %v550 = vsub.f32 %v548, 1.0
        %v551 = vsel %vm541, %v536, %v549
        %v552 = vsel %vm542, %v539, %v550
        %553 = vmatpush.msra.mxu0 %v339
        %554 = vmatpush.msra.mxu0 %v338
        %555 = vmatpush.msra.mxu0 %v337
        %556 = vmatpush.msra.mxu0 %v336
        %557 = vmatpush.msra.mxu0 %v335
        %558 = vmatpush.msra.mxu0 %v334
        %559 = vmatpush.msra.mxu0 %v333
        %560 = vmatpush.msra.mxu0 %v332
        %561 = vmatpush.msra.mxu0 %v331
        %562 = vmatpush.msra.mxu0 %v330
        %563 = vmatpush.msra.mxu0 %v329
        %564 = vmatpush.msra.mxu0 %v328
        %565 = vmatpush.msra.mxu0 %v327
        %566 = vmatpush.msra.mxu0 %v326
        %567 = vmatpush.msra.mxu0 %v325
        %568 = vmatpush.msra.mxu0 %v324
        %569 = vmatmul.f32.gmra.mxu0 %v551
        %v570 = vpop.f32.mrf.mxu0
        %v571 = vadd.f32 0.0, %v570
        %572 = vmatmul.f32.gmra.mxu0 %v552
        %v573 = vpop.f32.mrf.mxu0
        %v574 = vadd.f32 0.0, %v573
        %575 = vdwg.mxu0
        %576 = vmatpush.msra.mxu0 %v355
        %577 = vmatpush.msra.mxu0 %v354
        %578 = vmatpush.msra.mxu0 %v353
        %579 = vmatpush.msra.mxu0 %v352
        %580 = vmatpush.msra.mxu0 %v351
        %581 = vmatpush.msra.mxu0 %v350
        %582 = vmatpush.msra.mxu0 %v349
        %583 = vmatpush.msra.mxu0 %v348
        %584 = vmatpush.msra.mxu0 %v347
        %585 = vmatpush.msra.mxu0 %v346
        %586 = vmatpush.msra.mxu0 %v345
        %587 = vmatpush.msra.mxu0 %v344
        %588 = vmatpush.msra.mxu0 %v343
        %589 = vmatpush.msra.mxu0 %v342
        %590 = vmatpush.msra.mxu0 %v341
        %591 = vmatpush.msra.mxu0 %v340
        %592 = vmatmul.f32.gmra.mxu0 %v571
        %v593 = vpop.f32.mrf.mxu0
        %v594 = vadd.f32 0.0, %v593
        %595 = vmatmul.f32.gmra.mxu0 %v574
        %v596 = vpop.f32.mrf.mxu0
        %v597 = vadd.f32 0.0, %v596
        %598 = vdwg.mxu0
        %601 = vrot.lane.b32.xlu0 %v594, 127
        %v602 = vpop.permute.xlu0 %601
        %603 = vrot.lane.b32.xlu0 %v597, 127
        %v604 = vpop.permute.xlu0 %603
        %607 = vxpose.xlu0.b32.start [1/16] %v602, 128
        %608 = vxpose.xlu0.b32.cont [2/16] %v604, 128
        %609 = vxpose.xlu0.b32.cont [3/16] 0.0, 128
        %610 = vxpose.xlu0.b32.cont [4/16] 0.0, 128
        %611 = vxpose.xlu0.b32.cont [5/16] 0.0, 128
        %612 = vxpose.xlu0.b32.cont [6/16] 0.0, 128
        %613 = vxpose.xlu0.b32.cont [7/16] 0.0, 128
        %614 = vxpose.xlu0.b32.cont [8/16] 0.0, 128
        %615 = vxpose.xlu0.b32.cont [9/16] 0.0, 128
        %616 = vxpose.xlu0.b32.cont [10/16] 0.0, 128
        %617 = vxpose.xlu0.b32.cont [11/16] 0.0, 128
        %618 = vxpose.xlu0.b32.cont [12/16] 0.0, 128
        %619 = vxpose.xlu0.b32.cont [13/16] 0.0, 128
        %620 = vxpose.xlu0.b32.cont [14/16] 0.0, 128
        %621 = vxpose.xlu0.b32.cont [15/16] 0.0, 128
        %622 = vxpose.xlu0.b32.end [16/16] 0.0, 128
        %v623 = vpop.trf.xlu0
        %v624 = vpop.trf.xlu0
        %v625 = vpop.trf.xlu0
        %v626 = vpop.trf.xlu0
        %v627 = vpop.trf.xlu0
        %v628 = vpop.trf.xlu0
        %v629 = vpop.trf.xlu0
        %v630 = vpop.trf.xlu0
        %v631 = vpop.trf.xlu0
        %v632 = vpop.trf.xlu0
        %v633 = vpop.trf.xlu0
        %v634 = vpop.trf.xlu0
        %v635 = vpop.trf.xlu0
        %v636 = vpop.trf.xlu0
        %v637 = vpop.trf.xlu0
        %v638 = vpop.trf.xlu0
        %639 = vset.pattern.permute.xlu0 0
        %640 = vperm.xlu0 %639, %v594
        %v641 = vpop.permute.xlu0 %640
        %643 = vset.pattern.permute.xlu0 0
        %644 = vperm.xlu0 %643, %v597
        %v645 = vpop.permute.xlu0 %644
        %v647 = vperm.slane %v623, 0
        %v648 = vadd.f32 %v641, %v647
        %v649 = vadd.f32 %v645, %v647
        %vm650 = vcmp.gt.f32.partialorder %v648, 0.0
        %vm651 = vcmp.gt.f32.partialorder %v649, 0.0
        %v652 = vmul.f32 %v648, 0.2
        %v653 = vmul.f32 %v649, 0.2
        %v654 = vsel %vm650, %v648, %v652
        %v655 = vsel %vm651, %v649, %v653
        %v656 = vsel %vm459, %v654, -9e+15
        %v657 = vsel %vm460, %v655, -9e+15
        %v658 = vsel %vm463, %v656, -inf
        %659 = vmax.xlane.f32.xlu0 %v658
        %v660 = vpop.xlane.xlu0 %659
        %v661 = vsel %vm463, %v657, -inf
        %662 = vmax.xlane.f32.xlu0 %v661
        %v663 = vpop.xlane.xlu0 %662
        %v664 = vsub.f32 %v656, %v660
        %v665 = vsub.f32 %v657, %v663
        %v666 = vmul.f32 %v664, 1.442695
        %v667 = vpow.pop %v666
        %v668 = vmul.f32 %v665, 1.442695
        %v669 = vpow.pop %v668
        %v670 = vsel %vm463, %v667, 0.0
        %671 = vadd.xlane.f32.xlu0 %v670
        %v672 = vpop.xlane.xlu0 %671
        %v673 = vsel %vm463, %v669, 0.0
        %674 = vadd.xlane.f32.xlu0 %v673
        %v675 = vpop.xlane.xlu0 %674
        %v676 = vrcp.pop %v672
        %v677 = vmul.f32 %v672, %v676
        %v678 = vsub.f32 1.0, %v677
        %v679 = vmul.f32 %v676, %v678
        %v680 = vadd.f32 %v676, %v679
        %vm681 = vweird.f32 %v672
        %vm682 = vweird.f32 %v676
        %vm683 = vmor %vm681, %vm682
        %v684 = vsel %vm683, %v676, %v680
        %v685 = vand.u32 2147483647, %v672
        %vm686 = vcmp.eq.f32.partialorder %v685, 8.507059e+37
        %v687 = vand.u32 %v672, 2147483648
        %v688 = vor.u32 1.1754944e-38, %v687
        %v689 = vsel %vm686, %v688, %v684
        %v690 = vrcp.pop %v675
        %v691 = vmul.f32 %v675, %v690
        %v692 = vsub.f32 1.0, %v691
        %v693 = vmul.f32 %v690, %v692
        %v694 = vadd.f32 %v690, %v693
        %vm695 = vweird.f32 %v675
        %vm696 = vweird.f32 %v690
        %vm697 = vmor %vm695, %vm696
        %v698 = vsel %vm697, %v690, %v694
        %v699 = vand.u32 2147483647, %v675
        %vm700 = vcmp.eq.f32.partialorder %v699, 8.507059e+37
        %v701 = vand.u32 %v675, 2147483648
        %v702 = vor.u32 1.1754944e-38, %v701
        %v703 = vsel %vm700, %v702, %v698
        %v704 = vmul.f32 %v667, %v689
        %v705 = vmul.f32 %v669, %v703
        %v707 = vsel %vm463, %v704, 0
        %v710 = vsel %vm463, %v705, 0
        %712 = vmatpush.msra.mxu0 0.0
        %713 = vmatpush.msra.mxu0 0.0
        %714 = vmatpush.msra.mxu0 0.0
        %715 = vmatpush.msra.mxu0 0.0
        %716 = vmatpush.msra.mxu0 0.0
        %717 = vmatpush.msra.mxu0 0.0
        %718 = vmatpush.msra.mxu0 0.0
        %719 = vmatpush.msra.mxu0 0.0
        %720 = vmatpush.msra.mxu0 0.0
        %721 = vmatpush.msra.mxu0 0.0
        %722 = vmatpush.msra.mxu0 0.0
        %723 = vmatpush.msra.mxu0 0.0
        %724 = vmatpush.msra.mxu0 0.0
        %725 = vmatpush.msra.mxu0 0.0
        %726 = vmatpush.msra.mxu0 %v574
        %727 = vmatpush.msra.mxu0 %v571
        %728 = vmatmul.f32.gmra.mxu0 %v707
        %v729 = vpop.f32.mrf.mxu0
        %v730 = vadd.f32 0.0, %v729
        %731 = vmatmul.f32.gmra.mxu0 %v710
        %v732 = vpop.f32.mrf.mxu0
        %v733 = vadd.f32 0.0, %v732
        %734 = vdwg.mxu0
        %v735 = vld [vmem:[%s4] sm:$0x3]
        %v737 = vsel %vm463, %v735, 0
        %739 = vmatpush.msra.mxu0 0.0
        %740 = vmatpush.msra.mxu0 0.0
        %741 = vmatpush.msra.mxu0 0.0
        %742 = vmatpush.msra.mxu0 0.0
        %743 = vmatpush.msra.mxu0 0.0
        %744 = vmatpush.msra.mxu0 0.0
        %745 = vmatpush.msra.mxu0 0.0
        %746 = vmatpush.msra.mxu0 0.0
        %747 = vmatpush.msra.mxu0 0.0
        %748 = vmatpush.msra.mxu0 0.0
        %749 = vmatpush.msra.mxu0 0.0
        %750 = vmatpush.msra.mxu0 0.0
        %751 = vmatpush.msra.mxu0 0.0
        %752 = vmatpush.msra.mxu0 0.0
        %753 = vmatpush.msra.mxu0 %v733
        %754 = vmatpush.msra.mxu0 %v730
        %755 = vmatmul.f32.gmra.mxu0 %v737
        %v756 = vpop.f32.mrf.mxu0
        %v757 = vadd.f32 0.0, %v756
        %758 = vdwg.mxu0
        %759 = vst [vmem:[%s319] sm:$0x3] %v757
        %s760 = sand.u32 %s149, 1
        %s761 = scalar_lea.sflag [#allocation4], %s760
        %s762 = sand.u32 %s149, 1
        %s763 = smul.addr %s762, 2
        %s764 = scalar_lea.vmem [#allocation10], %s763
        // Predicated region
        $region57: #{tpu_custom_call.1} parent=39 // pred_check
          %p765 = pneg %p159
        $region58: #{tpu_custom_call.1} parent=39 // pred_check_branch
          %767 = sbr.rel (%p765) target = $region60
        $region59: #{tpu_custom_call.1} parent=39 // pred_region
          %769 = vsyncadd %s761, 0
          %s770 = smul.addr %s26, 2
          %s771 = scalar_lea.hbm %s5, %s770
          %s773 = sshll.u32 %s764, 4
          %s774 = int_to_ptr.vmem [resolvable:$true] %s773
          %s775 = sshll.u32 %s771, 4
          %s776 = int_to_ptr.hbm [resolvable:$true] %s775
          %778 = dma.vmem_to_hbm [thread:$0]  %s774, 32, %s776, %s761
        $region60: #{tpu_custom_call.1} parent=39 // pred_fallthru
          _
      $region40: #{tpu_custom_call.1} parent=5 // pred_fallthru
        _
      %p779 = scmp.le.s32.totalorder 2, %s21
      // Predicated region
      $region61: #{tpu_custom_call.1} parent=5 // pred_check
        %p780 = pneg %p779
      $region62: #{tpu_custom_call.1} parent=5 // pred_check_branch
        %782 = sbr.rel (%p780) target = $region64
      $region63: #{tpu_custom_call.1} parent=5 // pred_region
        %s783 = ssub.s32 %s21, 2
        // Predicated region
        $region65: #{tpu_custom_call.1} parent=63 // pred_check
          %p784 = pneg %p165
        $region66: #{tpu_custom_call.1} parent=63 // pred_check_branch
          %786 = sbr.rel (%p784) target = $region68
        $region67: #{tpu_custom_call.1} parent=63 // pred_region
          %s787 = sand.u32 %s150, 1
          %s788 = scalar_lea.sflag [#allocation4], %s787
          %s789 = sand.u32 %s150, 1
          %s790 = smul.addr %s789, 2
          %s791 = scalar_lea.vmem [#allocation10], %s790
          %793 = dma.done %s788, 32
        $region68: #{tpu_custom_call.1} parent=63 // pred_fallthru
          _
      $region64: #{tpu_custom_call.1} parent=5 // pred_fallthru
        _
    $region6: #{tpu_custom_call.1} parent=1 // loop_footer
      %s25 = sadd.s32 1, %s21
    $region7: #{tpu_custom_call.1} parent=1 // loop_footer_branch
      %20 = sbr.rel target = $region3
    $region8: #{tpu_custom_call.1} parent=1 // loop_exit
      _
    %794 = vsyncpa [#allocation3], 1
    %s795 = scalar_lea.sflag [#allocation3], 1
    %796 = vsyncpa %s795, 1
    %797 = vsyncpa [#allocation6], 1
    %s798 = scalar_lea.sflag [#allocation6], 1
    %799 = vsyncpa %s798, 1
    %800 = vsyncpa [#allocation9], 1
    %801 = vsyncpa [#allocation4], 1
    %s802 = scalar_lea.sflag [#allocation4], 1
    %803 = vsyncpa %s802, 1

</llo_original>
